<compile_context>
chip_gen: v7x
topology: tpu7x:2x2x1
jax: 0.10.0
libtpu: 0.0.40
codegen_flags: <defaults>
</compile_context>

<pallas_src>
import jax
import jax.numpy as jnp
from jax.experimental import pallas as pl
from jax.experimental.pallas import tpu as pltpu


_TARGET_BLOCK_BYTES = 4 * 1024 * 1024   # ~4 MiB per block
_VMEM_LIMIT_BYTES = 32 * 1024 * 1024    # in+out, double-buffered: 4x4 MiB = 16 MiB


def _copy_kernel(x_ref, o_ref):
    # Hot path: straight VMEM copy of the current tile.
    o_ref[...] = x_ref[...]


def _sublane_multiple(dtype) -> int:
    # Sub-32-bit dtypes pack along sublanes: 8 rows for 4B, 16 for 2B, 32 for 1B.
    itemsize = jnp.dtype(dtype).itemsize
    return 8 * max(1, 4 // max(1, itemsize))


def _choose_tile_rows(rows: int, cols: int, itemsize: int, sub: int) -> int:
    # Target ~4 MiB blocks; keep the row count a multiple of the sublane packing
    # unless the block covers the full row extent (full-extent blocks are legal).
    tr = max(sub, (_TARGET_BLOCK_BYTES // (cols * itemsize)) // sub * sub)
    if tr < rows:
        return tr
    # One block would cover everything: split into >=2 grid steps when possible
    # so v7x can shard the row axis across its 2 TensorCores.
    if rows >= 2 * sub:
        half = (rows + 1) // 2
        return ((half + sub - 1) // sub) * sub
    return rows  # full-extent block (allowed even if not a sublane multiple)


def _tiled_copy_2d(x2d: jax.Array) -> jax.Array:
    rows, cols = x2d.shape
    itemsize = jnp.dtype(x2d.dtype).itemsize
    sub = _sublane_multiple(x2d.dtype)
    tr = _choose_tile_rows(rows, cols, itemsize, sub)
    grid = (pl.cdiv(rows, tr),)
    nbytes = rows * cols * itemsize

    return pl.pallas_call(
        _copy_kernel,
        out_shape=jax.ShapeDtypeStruct((rows, cols), x2d.dtype),
        grid_spec=pltpu.PrefetchScalarGridSpec(
            num_scalar_prefetch=0,
            grid=grid,
            in_specs=[pl.BlockSpec((tr, cols), lambda i: (i, 0))],
            out_specs=pl.BlockSpec((tr, cols), lambda i: (i, 0)),
        ),
        compiler_params=pltpu.CompilerParams(
            dimension_semantics=("parallel",),
            vmem_limit_bytes=_VMEM_LIMIT_BYTES,
        ),
        cost_estimate=pl.CostEstimate(
            flops=0, transcendentals=0, bytes_accessed=2 * nbytes
        ),
    )(x2d)


def identity(x: jax.Array) -> jax.Array:
    """Pallas identity: returns a tensor equal to x (same shape/dtype)."""
    if x.size == 0:
        return x

    orig_shape = x.shape
    n = x.size

    # Common case: pick the widest lane-friendly column count that divides n
    # exactly -> no padding passes, lane-dense (unmasked) stores.
    for cols in (1024, 512, 256, 128):
        if n % cols == 0:
            out2d = _tiled_copy_2d(x.reshape(n // cols, cols))
            return out2d.reshape(orig_shape)

    # Ragged case (n not a multiple of 128), small enough to be one VMEM block:
    # a full-extent (1, n) block is exempt from the (8, 128) divisibility rule,
    # so no padding is needed.
    itemsize = jnp.dtype(x.dtype).itemsize
    if n * itemsize <= _TARGET_BLOCK_BYTES:
        out2d = pl.pallas_call(
            _copy_kernel,
            out_shape=jax.ShapeDtypeStruct((1, n), x.dtype),
            compiler_params=pltpu.CompilerParams(
                vmem_limit_bytes=_VMEM_LIMIT_BYTES
            ),
        )(x.reshape(1, n))
        return out2d.reshape(orig_shape)

    # TODO(synk): large ragged tensors (n % 128 != 0 and > 4 MiB) fall back to a
    # padded copy; a masked in-kernel tail store would avoid the extra HBM pass.
    lanes = 128
    rows = pl.cdiv(n, lanes)
    pad = rows * lanes - n
    x_flat = jnp.concatenate([x.reshape(-1), jnp.zeros((pad,), dtype=x.dtype)])
    out2d = _tiled_copy_2d(x_flat.reshape(rows, lanes))
    return out2d.reshape(-1)[:n].reshape(orig_shape)


if __name__ == "__main__":
    key = jax.random.PRNGKey(0)
    # NCHW input, small shapes: batch=2, channels=4, spatial=16x16
    x = jax.random.normal(key, (2, 4, 16, 16), dtype=jnp.float32)

    y = identity(x)
    y = jax.block_until_ready(y)

    assert y.shape == x.shape and y.dtype == x.dtype
    assert bool(jnp.all(y == x))
    print("KERNEL_OK")
</pallas_src>

<mosaic_0001>
module attributes {stable_mosaic.version = 11 : i64} {
  func.func @_copy_kernel(%arg0: i32, %arg1: memref<2x1024xf32, #tpu.memory_space<vmem>>, %arg2: memref<2x1024xf32, #tpu.memory_space<vmem>>) attributes {dimension_semantics = [#tpu.dimension_semantics<parallel>], iteration_bounds = array<i64: 1>, scalar_prefetch = 0 : i64, scratch_operands = 0 : i64, tpu.core_type = #tpu.core_type<tc>, window_params = [{transform_indices = @transform_0, window_bounds = array<i64: 2, 1024>}, {transform_indices = @transform_1, window_bounds = array<i64: 2, 1024>}]} {
    %c0 = arith.constant 0 : index
    %c0_0 = arith.constant 0 : index
    %0 = vector.load %arg1[%c0, %c0_0] : memref<2x1024xf32, #tpu.memory_space<vmem>>, vector<2x1024xf32>
    %c0_1 = arith.constant 0 : index
    %c0_2 = arith.constant 0 : index
    %1 = vector.load %arg2[%c0_1, %c0_2] : memref<2x1024xf32, #tpu.memory_space<vmem>>, vector<2x1024xf32>
    tpu.vector_store %arg2[%c0_1, %c0_2], %0 {strides = array<i32>} : memref<2x1024xf32, #tpu.memory_space<vmem>>, vector<2x1024xf32>,
    return
  }
  func.func @transform_0(%arg0: i32) -> (i32, i32) {
    %c0_i32 = arith.constant 0 : i32
    %c0_i32_0 = arith.constant 0 : i32
    return %arg0, %c0_i32 : i32, i32
  }
  func.func @transform_1(%arg0: i32) -> (i32, i32) {
    %c0_i32 = arith.constant 0 : i32
    %c0_i32_0 = arith.constant 0 : i32
    return %arg0, %c0_i32 : i32, i32
  }
}

</mosaic_0001>

<llo_original>
// kernel: tpu_custom_call.1
$region0: #{tpu_custom_call.1}
  #allocation0 [shape = 'u32[]', space=smem, size = 0x4, offset = 0x4, fixed_abs, tag = 'smem constant byte address 0x4 - core index']
  #allocation1 [shape = 'u32[144,128]{1,0:T(1,128)}', space=vmem, size = 0x12000, scoped, tag = 'internal scratch']
  %s0 = inlined_call_operand.hbm [shape: f32[2,1024], index: 0, kind: input, shape index: {}]
  %s1 = inlined_call_operand.hbm [shape: f32[2,1024], index: 1, kind: output, shape index: {}]
  %s2 = sld [smem:[#allocation0]]
  $region18: #{tpu_custom_call.1} parent=0
    _
  %s4 = ssub.s32 1, %s2
  %s5 = scalar_select 0, %s4, %s2
  $region1: #{tpu_custom_call.1} parent=0
    #allocation2 [shape = 'u8[8192]{0}', space=vmem, size = 0x2000, scoped, tag = 'input window, operand 0, single buffered']
    #allocation3 [shape = 's32[1]{0}', space=sflag, size = 0x4, scoped, tag = 'scoped memory for tpu_custom_call.1']
    #allocation4 [shape = 's32[1]{0}', space=sflag, size = 0x4, scoped, tag = 'scoped memory for tpu_custom_call.1']
    #allocation5 [shape = 'u8[8192]{0}', space=vmem, size = 0x2000, scoped, tag = 'output window, operand 0, single buffered']
    %6 = vsyncpa [#allocation3], 0
    %7 = vsyncpa [#allocation4], 0
    // Predicated region
    $region2: #{tpu_custom_call.1} parent=1 // pred_check
      _
    $region3: #{tpu_custom_call.1} parent=1 // pred_check_branch
      %9 = sbr.rel (0) target = $region5
    $region4: #{tpu_custom_call.1} parent=1 // pred_region
      %s11 = ssub.s32 256, 256
      %12 = vsyncadd [#allocation3], %s11
      %s14 = sshll.u32 [#allocation2], 4
      %s15 = int_to_ptr.vmem [resolvable:$true] %s14
      %17 = dma.hbm_to_vmem [thread:$0]  %s0, 256, %s15, [#allocation3]
    $region5: #{tpu_custom_call.1} parent=1 // pred_fallthru
      _
    // Predicated region
    $region6: #{tpu_custom_call.1} parent=1 // pred_check
      _
    $region7: #{tpu_custom_call.1} parent=1 // pred_check_branch
      %19 = sbr.rel (0) target = $region9
    $region8: #{tpu_custom_call.1} parent=1 // pred_region
      %20 = dma.done [#allocation3], 256
    $region9: #{tpu_custom_call.1} parent=1 // pred_fallthru
      _
    %v21 = vld [vmem:[#allocation2] sm:$0xff]
    %v22 = vld [vmem:[#allocation2 + $0x8] sm:$0xff]
    %23 = vst [vmem:[#allocation5] sm:$0xff] %v21
    %24 = vst [vmem:[#allocation5 + $0x8] sm:$0xff] %v22
    // Predicated region
    $region10: #{tpu_custom_call.1} parent=1 // pred_check
      _
    $region11: #{tpu_custom_call.1} parent=1 // pred_check_branch
      %26 = sbr.rel (0) target = $region13
    $region12: #{tpu_custom_call.1} parent=1 // pred_region
      %s28 = ssub.s32 256, 256
      %29 = vsyncadd [#allocation4], %s28
      %s31 = sshll.u32 [#allocation5], 4
      %s32 = int_to_ptr.vmem [resolvable:$true] %s31
      %34 = dma.vmem_to_hbm [thread:$0]  %s32, 256, %s1, [#allocation4]
    $region13: #{tpu_custom_call.1} parent=1 // pred_fallthru
      _
    // Predicated region
    $region14: #{tpu_custom_call.1} parent=1 // pred_check
      _
    $region15: #{tpu_custom_call.1} parent=1 // pred_check_branch
      %36 = sbr.rel (0) target = $region17
    $region16: #{tpu_custom_call.1} parent=1 // pred_region
      %37 = dma.done [#allocation4], 256
    $region17: #{tpu_custom_call.1} parent=1 // pred_fallthru
      _
    %38 = vsyncpa [#allocation3], 1
    %39 = vsyncpa [#allocation4], 1

</llo_original>
